<compile_context>
chip_gen: v6e
topology: v6e:2x2x1
jax: 0.10.0
libtpu: 0.0.40
codegen_flags: <defaults>
</compile_context>

<pallas_src>
import jax
import jax.numpy as jnp
from jax.experimental import pallas as pl
from jax.experimental.pallas import tpu as pltpu

LANE = 128


def _round_up(n, m):
    return ((n + m - 1) // m) * m


def _choose_p_tile(P_pad, cap=512):
    """Largest multiple-of-128 tile <= cap that divides P_pad (P_pad % 128 == 0)."""
    best = LANE
    t = 2 * LANE
    while t <= min(P_pad, cap):
        if P_pad % t == 0:
            best = t
        t += LANE
    return best


def _pointnet_mlp_kernel(x_ref, w1_ref, b1_ref, w2_ref, b2_ref, w3_ref, b3_ref,
                         out_ref, acc_ref):
    """Grid = (batch, point-split, point-tiles). Last axis is a max-reduction."""
    t = pl.program_id(2)

    @pl.when(t == 0)
    def _():
        # ReLU output is >= 0, so 0 is a valid identity for the running max.
        acc_ref[...] = jnp.zeros_like(acc_ref)

    x = x_ref[0]                     # (C0, Pt) f32 — points lane-dense
    w1 = w1_ref[...]                 # (C1p, C0) f32, BN scale pre-folded
    c0 = x.shape[0]

    # Layer 1 on the VPU: K = C0 is tiny, the MXU would be ~1-3% utilized.
    h = w1[:, 0:1] * x[0:1, :]
    for c in range(1, c0):
        h = h + w1[:, c:c + 1] * x[c:c + 1, :]
    h = jnp.maximum(h + b1_ref[...], 0.0)            # (C1p, Pt) f32

    # Layers 2/3 on the MXU: bf16 operands, f32 accumulation, folded BN bias.
    h = jnp.dot(w2_ref[...], h.astype(jnp.bfloat16),
                preferred_element_type=jnp.float32)
    h = jnp.maximum(h + b2_ref[...], 0.0)            # (C2p, Pt) f32
    h = jnp.dot(w3_ref[...], h.astype(jnp.bfloat16),
                preferred_element_type=jnp.float32)
    h = jnp.maximum(h + b3_ref[...], 0.0)            # (C3p, Pt) f32

    # Fold the 128-lane groups with static vreg-aligned slices (pure VPU vmax),
    # then one elementwise max into the small (C3p, 128) accumulator.
    m = h[:, 0:LANE]
    for g in range(1, h.shape[1] // LANE):
        m = jnp.maximum(m, h[:, g * LANE:(g + 1) * LANE])
    acc_ref[...] = jnp.maximum(acc_ref[...], m)

    @pl.when(t == pl.num_programs(2) - 1)
    def _():
        # Single cross-lane reduce per (batch, split).
        out_ref[0, 0] = jnp.max(acc_ref[...], axis=1,
                                keepdims=True).astype(out_ref.dtype)


def pointnet_mlp_forward(x_nchw, params, *, p_tile_cap=512):
    """x_nchw: (B, C0, H, W) float32. Returns (B, C3) float32."""
    N, C0, H, W = x_nchw.shape
    P = H * W

    # Free reshape of NCHW (no transpose, no cast pre-pass through HBM).
    x = x_nchw.reshape(N, C0, P).astype(jnp.float32)

    # Points land on the 128-lane axis; pad by edge replication (duplicated
    # points never change the global max).
    P_pad = _round_up(max(P, LANE), LANE)
    if P_pad != P:
        x = jnp.pad(x, ((0, 0), (0, 0), (0, P_pad - P)), mode="edge")

    p_tile = _choose_p_tile(P_pad, p_tile_cap)
    n_tiles = P_pad // p_tile
    split = 2 if n_tiles % 2 == 0 else 1      # exposes both TCs on v7x at B==1
    tiles_per_split = n_tiles // split

    w1, b1, w2, b2, w3, b3 = params
    C1, C2, C3 = w1.shape[0], w2.shape[0], w3.shape[0]
    # Channels sit on the sublane axis -> pad only to 16 (bf16 packing), not 128.
    C1p, C2p, C3p = (_round_up(c, 16) for c in (C1, C2, C3))

    # Padded output channels stay exactly 0 through the stack (zero weights,
    # zero bias, ReLU), so they never affect real channels and are stripped.
    def pad_w(w, rp, cp):
        return jnp.zeros((rp, cp), w.dtype).at[:w.shape[0], :w.shape[1]].set(w)

    def pad_b(b, rp):
        return jnp.zeros((rp, 1), b.dtype).at[:b.shape[0], :].set(b)

    w1p = pad_w(w1, C1p, C0).astype(jnp.float32)     # layer 1 stays f32 (VPU FMA)
    w2p = pad_w(w2, C2p, C1p).astype(jnp.bfloat16)
    w3p = pad_w(w3, C3p, C2p).astype(jnp.bfloat16)
    b1p, b2p, b3p = pad_b(b1, C1p), pad_b(b2, C2p), pad_b(b3, C3p)

    def x_map(b, s, t):
        return (b, 0, s * tiles_per_split + t)

    full = lambda b, s, t: (0, 0)

    out = pl.pallas_call(
        _pointnet_mlp_kernel,
        out_shape=jax.ShapeDtypeStruct((N, split, C3p, 1), jnp.float32),
        grid_spec=pltpu.PrefetchScalarGridSpec(
            num_scalar_prefetch=0,
            grid=(N, split, tiles_per_split),
            in_specs=[
                pl.BlockSpec((1, C0, p_tile), x_map),
                pl.BlockSpec(w1p.shape, full),
                pl.BlockSpec(b1p.shape, full),
                pl.BlockSpec(w2p.shape, full),
                pl.BlockSpec(b2p.shape, full),
                pl.BlockSpec(w3p.shape, full),
                pl.BlockSpec(b3p.shape, full),
            ],
            out_specs=pl.BlockSpec((1, 1, C3p, 1), lambda b, s, t: (b, s, 0, 0)),
            scratch_shapes=[pltpu.VMEM((C3p, LANE), jnp.float32)],
        ),
        compiler_params=pltpu.CompilerParams(
            dimension_semantics=("parallel", "parallel", "arbitrary"),
            vmem_limit_bytes=48 * 1024 * 1024),
    )(x, w1p, b1p, w2p, b2p, w3p, b3p)

    out = jnp.max(out.reshape(N, split, C3p), axis=1)   # combine split partials
    return out[:, :C3]


def make_params(key, mlp_spec, eps=1e-5):
    """Deterministic folded (Conv1x1 + eval-mode BatchNorm) params.

    Per layer: y = ((x W^T + b_conv) - mean) * gamma/sqrt(var+eps) + beta
    folded into (W_folded, bias_total) with the BN scale pre-multiplied into
    the weight rows:  W_folded = W * scale[:, None],
                      bias_total = (b_conv - mean) * scale + beta.
    W_folded has shape (c_out, c_in); bias_total has shape (c_out, 1).
    """
    assert len(mlp_spec) == 4
    params = []
    for i in range(3):
        c_in, c_out = mlp_spec[i], mlp_spec[i + 1]
        key, kw, kb, kg, kbt, km, kv = jax.random.split(key, 7)
        w_conv = 0.1 * jax.random.normal(kw, (c_out, c_in), jnp.float32)
        b_conv = 0.1 * jax.random.normal(kb, (c_out,), jnp.float32)
        gamma = 1.0 + 0.1 * jax.random.normal(kg, (c_out,), jnp.float32)
        beta = 0.1 * jax.random.normal(kbt, (c_out,), jnp.float32)
        mean = 0.1 * jax.random.normal(km, (c_out,), jnp.float32)
        var = jnp.abs(jax.random.normal(kv, (c_out,), jnp.float32)) + 0.5
        scale = gamma / jnp.sqrt(var + eps)
        params += [w_conv * scale[:, None],
                   ((b_conv - mean) * scale + beta).reshape(c_out, 1)]
    return tuple(params)


def reference_forward(x_nchw, params):
    """Pure-JAX f32 reference of the PyTorch forward (eval-mode BN folded)."""
    N, C0, H, W = x_nchw.shape
    x = x_nchw.reshape(N, C0, H * W).astype(jnp.float32)
    w1, b1, w2, b2, w3, b3 = params
    h = jnp.maximum(jnp.einsum("oi,nip->nop", w1, x) + b1[None], 0.0)
    h = jnp.maximum(jnp.einsum("oi,nip->nop", w2, h) + b2[None], 0.0)
    h = jnp.maximum(jnp.einsum("oi,nip->nop", w3, h) + b3[None], 0.0)
    # max_pool2d over nsamples then max over npoints == max over all points.
    return jnp.max(h, axis=-1)


if __name__ == "__main__":
    # Small shapes consistent with the module: (B, C0=3+C, npoints, nsamples).
    B, C0, NPOINTS, NSAMPLES = 2, 4, 16, 16
    mlp_spec = [C0, 8, 16, 32]

    key = jax.random.PRNGKey(0)
    key, kx = jax.random.split(key)
    x = jax.random.normal(kx, (B, C0, NPOINTS, NSAMPLES), jnp.float32)
    params = make_params(key, mlp_spec)

    out = jax.block_until_ready(pointnet_mlp_forward(x, params))
    ref = reference_forward(x, params)
    assert out.shape == (B, mlp_spec[-1])
    # bf16 weights/activations on layers 2-3 (f32 acc) vs f32 reference.
    assert jnp.allclose(out, ref, atol=3e-2, rtol=3e-2), (
        f"max abs err {jnp.max(jnp.abs(out - ref))}")

    # Second check: batch 1, more points -> exercises the 2-way point split
    # (the path that feeds both v7x TensorCores).
    key, kx2 = jax.random.split(key)
    x2 = jax.random.normal(kx2, (1, C0, 32, 32), jnp.float32)
    out2 = jax.block_until_ready(pointnet_mlp_forward(x2, params))
    ref2 = reference_forward(x2, params)
    assert out2.shape == (1, mlp_spec[-1])
    assert jnp.allclose(out2, ref2, atol=3e-2, rtol=3e-2), (
        f"max abs err {jnp.max(jnp.abs(out2 - ref2))}")

    print("KERNEL_OK")
</pallas_src>

<mosaic_0001>
module attributes {stable_mosaic.version = 11 : i64} {
  func.func @_pointnet_mlp_kernel(%arg0: i32, %arg1: i32, %arg2: i32, %arg3: memref<1x4x256xf32, #tpu.memory_space<vmem>>, %arg4: memref<16x4xf32, #tpu.memory_space<vmem>>, %arg5: memref<16x1xf32, #tpu.memory_space<vmem>>, %arg6: memref<16x16xbf16, #tpu.memory_space<vmem>>, %arg7: memref<16x1xf32, #tpu.memory_space<vmem>>, %arg8: memref<32x16xbf16, #tpu.memory_space<vmem>>, %arg9: memref<32x1xf32, #tpu.memory_space<vmem>>, %arg10: memref<1x1x32x1xf32, #tpu.memory_space<vmem>>, %arg11: memref<32x128xf32, #tpu.memory_space<vmem>>) attributes {dimension_semantics = [#tpu.dimension_semantics<parallel>, #tpu.dimension_semantics<parallel>, #tpu.dimension_semantics<arbitrary>], iteration_bounds = array<i64: 2, 1, 1>, scalar_prefetch = 0 : i64, scratch_operands = 1 : i64, tpu.core_type = #tpu.core_type<tc>, window_params = [{transform_indices = @transform_0, window_bounds = array<i64: 1, 4, 256>}, {pipeline_mode = #tpu.pipeline_mode<synchronous>, transform_indices = @transform_1, window_bounds = array<i64: 16, 4>}, {pipeline_mode = #tpu.pipeline_mode<synchronous>, transform_indices = @transform_2, window_bounds = array<i64: 16, 1>}, {pipeline_mode = #tpu.pipeline_mode<synchronous>, transform_indices = @transform_3, window_bounds = array<i64: 16, 16>}, {pipeline_mode = #tpu.pipeline_mode<synchronous>, transform_indices = @transform_4, window_bounds = array<i64: 16, 1>}, {pipeline_mode = #tpu.pipeline_mode<synchronous>, transform_indices = @transform_5, window_bounds = array<i64: 32, 16>}, {pipeline_mode = #tpu.pipeline_mode<synchronous>, transform_indices = @transform_6, window_bounds = array<i64: 32, 1>}, {transform_indices = @transform_7, window_bounds = array<i64: 1, 1, 32, 1>}]} {
    %c0_i32 = arith.constant 0 : i32
    %0 = arith.cmpi eq, %arg2, %c0_i32 : i32
    %1 = arith.extui %0 : i1 to i32
    %c0_i32_0 = arith.constant 0 : i32
    %2 = arith.cmpi ne, %1, %c0_i32_0 : i32
    scf.if %2 {
      %cst_25 = arith.constant 0.000000e+00 : f32
      %59 = vector.broadcast %cst_25 : f32 to vector<32x128xf32>
      %c0_26 = arith.constant 0 : index
      %c0_27 = arith.constant 0 : index
      %60 = vector.load %arg11[%c0_26, %c0_27] : memref<32x128xf32, #tpu.memory_space<vmem>>, vector<32x128xf32>
      tpu.vector_store %arg11[%c0_26, %c0_27], %59 {strides = array<i32>} : memref<32x128xf32, #tpu.memory_space<vmem>>, vector<32x128xf32>,
    } else {
    }
    %c0 = arith.constant 0 : index
    %c0_1 = arith.constant 0 : index
    %c0_2 = arith.constant 0 : index
    %3 = vector.load %arg3[%c0, %c0_1, %c0_2] : memref<1x4x256xf32, #tpu.memory_space<vmem>>, vector<1x4x256xf32>
    %4 = vector.shape_cast %3 : vector<1x4x256xf32> to vector<4x256xf32>
    %c0_3 = arith.constant 0 : index
    %c0_4 = arith.constant 0 : index
    %5 = vector.load %arg4[%c0_3, %c0_4] : memref<16x4xf32, #tpu.memory_space<vmem>>, vector<16x4xf32>
    %6 = vector.extract_strided_slice %5 {offsets = [0, 0], sizes = [16, 1], strides = [1, 1]} : vector<16x4xf32> to vector<16x1xf32>
    %7 = vector.extract_strided_slice %4 {offsets = [0, 0], sizes = [1, 256], strides = [1, 1]} : vector<4x256xf32> to vector<1x256xf32>
    %8 = vector.broadcast %6 : vector<16x1xf32> to vector<16x256xf32>
    %9 = vector.broadcast %7 : vector<1x256xf32> to vector<16x256xf32>
    %10 = arith.mulf %8, %9 : vector<16x256xf32>
    %11 = vector.extract_strided_slice %5 {offsets = [0, 1], sizes = [16, 1], strides = [1, 1]} : vector<16x4xf32> to vector<16x1xf32>
    %12 = vector.extract_strided_slice %4 {offsets = [1, 0], sizes = [1, 256], strides = [1, 1]} : vector<4x256xf32> to vector<1x256xf32>
    %13 = vector.broadcast %11 : vector<16x1xf32> to vector<16x256xf32>
    %14 = vector.broadcast %12 : vector<1x256xf32> to vector<16x256xf32>
    %15 = arith.mulf %13, %14 : vector<16x256xf32>
    %16 = arith.addf %10, %15 : vector<16x256xf32>
    %17 = vector.extract_strided_slice %5 {offsets = [0, 2], sizes = [16, 1], strides = [1, 1]} : vector<16x4xf32> to vector<16x1xf32>
    %18 = vector.extract_strided_slice %4 {offsets = [2, 0], sizes = [1, 256], strides = [1, 1]} : vector<4x256xf32> to vector<1x256xf32>
    %19 = vector.broadcast %17 : vector<16x1xf32> to vector<16x256xf32>
    %20 = vector.broadcast %18 : vector<1x256xf32> to vector<16x256xf32>
    %21 = arith.mulf %19, %20 : vector<16x256xf32>
    %22 = arith.addf %16, %21 : vector<16x256xf32>
    %23 = vector.extract_strided_slice %5 {offsets = [0, 3], sizes = [16, 1], strides = [1, 1]} : vector<16x4xf32> to vector<16x1xf32>
    %24 = vector.extract_strided_slice %4 {offsets = [3, 0], sizes = [1, 256], strides = [1, 1]} : vector<4x256xf32> to vector<1x256xf32>
    %25 = vector.broadcast %23 : vector<16x1xf32> to vector<16x256xf32>
    %26 = vector.broadcast %24 : vector<1x256xf32> to vector<16x256xf32>
    %27 = arith.mulf %25, %26 : vector<16x256xf32>
    %28 = arith.addf %22, %27 : vector<16x256xf32>
    %c0_5 = arith.constant 0 : index
    %c0_6 = arith.constant 0 : index
    %29 = vector.load %arg5[%c0_5, %c0_6] : memref<16x1xf32, #tpu.memory_space<vmem>>, vector<16x1xf32>
    %30 = vector.broadcast %29 : vector<16x1xf32> to vector<16x256xf32>
    %31 = arith.addf %28, %30 : vector<16x256xf32>
    %cst = arith.constant 0.000000e+00 : f32
    %32 = vector.broadcast %cst : f32 to vector<16x256xf32>
    %33 = arith.maximumf %31, %32 : vector<16x256xf32>
    %c0_7 = arith.constant 0 : index
    %c0_8 = arith.constant 0 : index
    %34 = vector.load %arg6[%c0_7, %c0_8] : memref<16x16xbf16, #tpu.memory_space<vmem>>, vector<16x16xbf16>
    %35 = arith.truncf %33 : vector<16x256xf32> to vector<16x256xbf16>
    %cst_9 = arith.constant dense<0.000000e+00> : vector<16x256xf32>
    %36 = tpu.matmul %34, %35, %cst_9 {dimension_numbers = #tpu.dot_dimension_numbers<[1], [0], [0], [1], [0, 0, 1, 1], [], []>} : vector<16x16xbf16>, vector<16x256xbf16>, vector<16x256xf32> -> vector<16x256xf32>
    %c0_10 = arith.constant 0 : index
    %c0_11 = arith.constant 0 : index
    %37 = vector.load %arg7[%c0_10, %c0_11] : memref<16x1xf32, #tpu.memory_space<vmem>>, vector<16x1xf32>
    %38 = vector.broadcast %37 : vector<16x1xf32> to vector<16x256xf32>
    %39 = arith.addf %36, %38 : vector<16x256xf32>
    %cst_12 = arith.constant 0.000000e+00 : f32
    %40 = vector.broadcast %cst_12 : f32 to vector<16x256xf32>
    %41 = arith.maximumf %39, %40 : vector<16x256xf32>
    %c0_13 = arith.constant 0 : index
    %c0_14 = arith.constant 0 : index
    %42 = vector.load %arg8[%c0_13, %c0_14] : memref<32x16xbf16, #tpu.memory_space<vmem>>, vector<32x16xbf16>
    %43 = arith.truncf %41 : vector<16x256xf32> to vector<16x256xbf16>
    %cst_15 = arith.constant dense<0.000000e+00> : vector<32x256xf32>
    %44 = tpu.matmul %42, %43, %cst_15 {dimension_numbers = #tpu.dot_dimension_numbers<[1], [0], [0], [1], [0, 0, 1, 1], [], []>} : vector<32x16xbf16>, vector<16x256xbf16>, vector<32x256xf32> -> vector<32x256xf32>
    %c0_16 = arith.constant 0 : index
    %c0_17 = arith.constant 0 : index
    %45 = vector.load %arg9[%c0_16, %c0_17] : memref<32x1xf32, #tpu.memory_space<vmem>>, vector<32x1xf32>
    %46 = vector.broadcast %45 : vector<32x1xf32> to vector<32x256xf32>
    %47 = arith.addf %44, %46 : vector<32x256xf32>
    %cst_18 = arith.constant 0.000000e+00 : f32
    %48 = vector.broadcast %cst_18 : f32 to vector<32x256xf32>
    %49 = arith.maximumf %47, %48 : vector<32x256xf32>
    %50 = vector.extract_strided_slice %49 {offsets = [0, 0], sizes = [32, 128], strides = [1, 1]} : vector<32x256xf32> to vector<32x128xf32>
    %51 = vector.extract_strided_slice %49 {offsets = [0, 128], sizes = [32, 128], strides = [1, 1]} : vector<32x256xf32> to vector<32x128xf32>
    %52 = arith.maximumf %50, %51 : vector<32x128xf32>
    %c0_19 = arith.constant 0 : index
    %c0_20 = arith.constant 0 : index
    %53 = vector.load %arg11[%c0_19, %c0_20] : memref<32x128xf32, #tpu.memory_space<vmem>>, vector<32x128xf32>
    %54 = arith.maximumf %53, %52 : vector<32x128xf32>
    %c0_21 = arith.constant 0 : index
    %c0_22 = arith.constant 0 : index
    %55 = vector.load %arg11[%c0_21, %c0_22] : memref<32x128xf32, #tpu.memory_space<vmem>>, vector<32x128xf32>
    tpu.vector_store %arg11[%c0_21, %c0_22], %54 {strides = array<i32>} : memref<32x128xf32, #tpu.memory_space<vmem>>, vector<32x128xf32>,
    %c0_i32_23 = arith.constant 0 : i32
    %56 = arith.cmpi eq, %arg2, %c0_i32_23 : i32
    %57 = arith.extui %56 : i1 to i32
    %c0_i32_24 = arith.constant 0 : i32
    %58 = arith.cmpi ne, %57, %c0_i32_24 : i32
    scf.if %58 {
      %c0_25 = arith.constant 0 : index
      %c0_26 = arith.constant 0 : index
      %59 = vector.load %arg11[%c0_25, %c0_26] : memref<32x128xf32, #tpu.memory_space<vmem>>, vector<32x128xf32>
      %cst_27 = arith.constant dense<0xFF800000> : vector<32xf32>
      %60 = vector.multi_reduction <maximumf>, %59, %cst_27 [1] : vector<32x128xf32> to vector<32xf32>
      %61 = vector.shape_cast %60 : vector<32xf32> to vector<32x1xf32>
      %c0_28 = arith.constant 0 : index
      %c0_29 = arith.constant 0 : index
      %c0_30 = arith.constant 0 : index
      %c0_31 = arith.constant 0 : index
      %62 = vector.load %arg10[%c0_28, %c0_29, %c0_30, %c0_31] : memref<1x1x32x1xf32, #tpu.memory_space<vmem>>, vector<1x1x32x1xf32>
      %63 = vector.shape_cast %62 : vector<1x1x32x1xf32> to vector<32x1xf32>
      %64 = vector.shape_cast %61 : vector<32x1xf32> to vector<1x1x32x1xf32>
      tpu.vector_store %arg10[%c0_28, %c0_29, %c0_30, %c0_31], %64 {strides = array<i32>} : memref<1x1x32x1xf32, #tpu.memory_space<vmem>>, vector<1x1x32x1xf32>,
    } else {
    }
    return
  }
  func.func @transform_0(%arg0: i32, %arg1: i32, %arg2: i32) -> (i32, i32, i32) {
    %c1_i32 = arith.constant 1 : i32
    %0 = arith.muli %arg1, %c1_i32 : i32
    %1 = arith.addi %0, %arg2 : i32
    %c0_i32 = arith.constant 0 : i32
    %c0_i32_0 = arith.constant 0 : i32
    return %arg0, %c0_i32, %1 : i32, i32, i32
  }
  func.func @transform_1(%arg0: i32, %arg1: i32, %arg2: i32) -> (i32, i32) {
    %c0_i32 = arith.constant 0 : i32
    %c0_i32_0 = arith.constant 0 : i32
    %c0_i32_1 = arith.constant 0 : i32
    return %c0_i32, %c0_i32_0 : i32, i32
  }
  func.func @transform_2(%arg0: i32, %arg1: i32, %arg2: i32) -> (i32, i32) {
    %c0_i32 = arith.constant 0 : i32
    %c0_i32_0 = arith.constant 0 : i32
    %c0_i32_1 = arith.constant 0 : i32
    return %c0_i32, %c0_i32_0 : i32, i32
  }
  func.func @transform_3(%arg0: i32, %arg1: i32, %arg2: i32) -> (i32, i32) {
    %c0_i32 = arith.constant 0 : i32
    %c0_i32_0 = arith.constant 0 : i32
    %c0_i32_1 = arith.constant 0 : i32
    return %c0_i32, %c0_i32_0 : i32, i32
  }
  func.func @transform_4(%arg0: i32, %arg1: i32, %arg2: i32) -> (i32, i32) {
    %c0_i32 = arith.constant 0 : i32
    %c0_i32_0 = arith.constant 0 : i32
    %c0_i32_1 = arith.constant 0 : i32
    return %c0_i32, %c0_i32_0 : i32, i32
  }
  func.func @transform_5(%arg0: i32, %arg1: i32, %arg2: i32) -> (i32, i32) {
    %c0_i32 = arith.constant 0 : i32
    %c0_i32_0 = arith.constant 0 : i32
    %c0_i32_1 = arith.constant 0 : i32
    return %c0_i32, %c0_i32_0 : i32, i32
  }
  func.func @transform_6(%arg0: i32, %arg1: i32, %arg2: i32) -> (i32, i32) {
    %c0_i32 = arith.constant 0 : i32
    %c0_i32_0 = arith.constant 0 : i32
    %c0_i32_1 = arith.constant 0 : i32
    return %c0_i32, %c0_i32_0 : i32, i32
  }
  func.func @transform_7(%arg0: i32, %arg1: i32, %arg2: i32) -> (i32, i32, i32, i32) {
    %c0_i32 = arith.constant 0 : i32
    %c0_i32_0 = arith.constant 0 : i32
    %c0_i32_1 = arith.constant 0 : i32
    return %arg0, %arg1, %c0_i32, %c0_i32_0 : i32, i32, i32, i32
  }
}

</mosaic_0001>

<llo_original>
// kernel: tpu_custom_call.1
$region0: #{tpu_custom_call.1}
  #allocation0 [shape = 'u32[]', space=smem, size = 0x4, offset = 0x4, fixed_abs, tag = 'smem constant byte address 0x4 - core index']
  #allocation1 [shape = 'u32[144,128]{1,0:T(1,128)}', space=vmem, size = 0x12000, scoped, tag = 'internal scratch']
  #allocation2 [shape = 'f32[32,128]{1,0:T(8,128)}', space=vmem, size = 0x4000, scoped, tag = 'scratch operand']
  %s0 = inlined_call_operand.vmem [shape: f32[2,4,256], index: 0, kind: input, shape index: {}]
  %s1 = inlined_call_operand.vmem [shape: f32[16,4], index: 1, kind: input, shape index: {}]
  %s2 = inlined_call_operand.vmem [shape: f32[16,1], index: 2, kind: input, shape index: {}]
  %s3 = inlined_call_operand.vmem [shape: bf16[16,16], index: 3, kind: input, shape index: {}]
  %s4 = inlined_call_operand.vmem [shape: f32[16,1], index: 4, kind: input, shape index: {}]
  %s5 = inlined_call_operand.vmem [shape: bf16[32,16], index: 5, kind: input, shape index: {}]
  %s6 = inlined_call_operand.vmem [shape: f32[32,1], index: 6, kind: input, shape index: {}]
  %s7 = inlined_call_operand.vmem [shape: f32[2,1,32,1], index: 7, kind: output, shape index: {}]
  %s8 = sld [smem:[#allocation0]]
  $region69: #{tpu_custom_call.1} parent=0
    _
  %s10 = ssub.s32 1, %s8
  %s11 = scalar_select 0, %s10, %s8
  loop: start=0, step=1, limit=4
  $region2: #{tpu_custom_call.1} parent=0 // loop_pre_header
    _
  $region3: #{tpu_custom_call.1} parent=0 // loop_header
    %s13 = sphi 0, %s17
    %p14 = scmp.ge.s32.totalorder %s13, 4
    %s20 = sphi 0, %s39
    %s21 = sphi 0, %s35
    %s22 = sphi 0, %s31
    %s23 = sphi 0, %s20
    %s24 = sphi 0, %s21
    %s25 = sphi 0, %s22
    %s26 = sphi 0, %s23
    %s27 = sphi 0, %s24
    %s28 = sphi 0, %s25
    %s46 = sphi 0, %s48
    %s49 = sphi 0, %s46
    %s50 = sphi 0, %s49
    %s66 = sphi 0, %s50
    %s70 = sphi 0, %s70
    %s72 = sphi 0, %s70
    %s73 = sphi 0, %s72
    %s87 = sphi 0, %s73
    %s91 = sphi 0, %s91
    %s93 = sphi 0, %s91
    %s94 = sphi 0, %s93
    %s108 = sphi 0, %s94
    %s112 = sphi 0, %s112
    %s114 = sphi 0, %s112
    %s115 = sphi 0, %s114
    %s129 = sphi 0, %s115
    %s133 = sphi 0, %s133
    %s135 = sphi 0, %s133
    %s136 = sphi 0, %s135
    %s150 = sphi 0, %s136
    %s154 = sphi 0, %s154
    %s156 = sphi 0, %s154
    %s157 = sphi 0, %s156
    %s171 = sphi 0, %s157
    %s175 = sphi 0, %s175
    %s177 = sphi 0, %s175
    %s178 = sphi 0, %s177
    %s192 = sphi 0, %s178
    %s200 = sphi 0, %s202
    %s203 = sphi 0, %s200
    %s204 = sphi 0, %s203
    %s220 = sphi 0, %s204
  $region4: #{tpu_custom_call.1} parent=0 // loop_header_branch
    %16 = sbr.rel (%p14) target = $region8
  $region5: #{tpu_custom_call.1} parent=0 // loop_body
    %s18 = ssub.s32 %s13, 1
    %s19 = ssub.s32 %s13, 2
    %s29 = sadd.s32 1, %s22
    %p30 = scmp.ge.s32.totalorder %s29, 1
    %s31 = scalar_select %p30, 0, %s29
    %s32 = sadd.s32 1, %s21
    %s33 = scalar_select %p30, %s32, %s21
    %p34 = scmp.ge.s32.totalorder %s33, 1
    %s35 = scalar_select %p34, 0, %s33
    %s36 = sadd.s32 1, %s20
    %s37 = scalar_select %p34, %s36, %s20
    %p38 = scmp.ge.s32.totalorder %s37, 2
    %s39 = scalar_select %p38, 0, %s37
    %s40 = sadd.s32 %s21, %s22
    %s41 = sadd.s32 %s35, %s31
    %s42 = ssub.s32 %s20, %s39
    %s43 = ssub.s32 %s40, %s41
    %s44 = sor.u32 %s42, %s43
    %p45 = scmp.eq.s32.totalorder %s44, 0
    %s47 = sadd.s32 %s46, 1
    %s48 = scalar_select %p45, %s46, %s47
    %p51 = pneg %p45
    %p52 = scmp.eq.s32.totalorder %s13, 1
    %p53 = por %p51, %p52
    %p54 = scmp.ne.s32.totalorder %s46, %s49
    %p55 = scmp.eq.s32.totalorder %s13, 0
    %p56 = por %p54, %p55
    %p57 = scmp.ne.s32.totalorder %s46, %s49
    %p58 = scmp.eq.s32.totalorder %s18, 1
    %p59 = por %p57, %p58
    %p60 = scmp.ne.s32.totalorder %s49, %s50
    %p61 = scmp.eq.s32.totalorder %s18, 0
    %p62 = por %p60, %p61
    %p63 = scmp.ne.s32.totalorder %s49, %s50
    %p64 = scmp.eq.s32.totalorder %s19, 1
    %p65 = por %p63, %p64
    %p67 = scmp.ne.s32.totalorder %s50, %s66
    %p68 = scmp.eq.s32.totalorder %s19, 0
    %p69 = por %p67, %p68
    %s71 = sadd.s32 %s70, 1
    %p74 = scmp.eq.s32.totalorder %s13, 1
    %p75 = scmp.ne.s32.totalorder %s70, %s72
    %p76 = scmp.eq.s32.totalorder %s13, 0
    %p77 = por %p75, %p76
    %p78 = scmp.ne.s32.totalorder %s70, %s72
    %p79 = scmp.eq.s32.totalorder %s18, 1
    %p80 = por %p78, %p79
    %p81 = scmp.ne.s32.totalorder %s72, %s73
    %p82 = scmp.eq.s32.totalorder %s18, 0
    %p83 = por %p81, %p82
    %p84 = scmp.ne.s32.totalorder %s72, %s73
    %p85 = scmp.eq.s32.totalorder %s19, 1
    %p86 = por %p84, %p85
    %p88 = scmp.ne.s32.totalorder %s73, %s87
    %p89 = scmp.eq.s32.totalorder %s19, 0
    %p90 = por %p88, %p89
    %s92 = sadd.s32 %s91, 1
    %p95 = scmp.eq.s32.totalorder %s13, 1
    %p96 = scmp.ne.s32.totalorder %s91, %s93
    %p97 = scmp.eq.s32.totalorder %s13, 0
    %p98 = por %p96, %p97
    %p99 = scmp.ne.s32.totalorder %s91, %s93
    %p100 = scmp.eq.s32.totalorder %s18, 1
    %p101 = por %p99, %p100
    %p102 = scmp.ne.s32.totalorder %s93, %s94
    %p103 = scmp.eq.s32.totalorder %s18, 0
    %p104 = por %p102, %p103
    %p105 = scmp.ne.s32.totalorder %s93, %s94
    %p106 = scmp.eq.s32.totalorder %s19, 1
    %p107 = por %p105, %p106
    %p109 = scmp.ne.s32.totalorder %s94, %s108
    %p110 = scmp.eq.s32.totalorder %s19, 0
    %p111 = por %p109, %p110
    %s113 = sadd.s32 %s112, 1
    %p116 = scmp.eq.s32.totalorder %s13, 1
    %p117 = scmp.ne.s32.totalorder %s112, %s114
    %p118 = scmp.eq.s32.totalorder %s13, 0
    %p119 = por %p117, %p118
    %p120 = scmp.ne.s32.totalorder %s112, %s114
    %p121 = scmp.eq.s32.totalorder %s18, 1
    %p122 = por %p120, %p121
    %p123 = scmp.ne.s32.totalorder %s114, %s115
    %p124 = scmp.eq.s32.totalorder %s18, 0
    %p125 = por %p123, %p124
    %p126 = scmp.ne.s32.totalorder %s114, %s115
    %p127 = scmp.eq.s32.totalorder %s19, 1
    %p128 = por %p126, %p127
    %p130 = scmp.ne.s32.totalorder %s115, %s129
    %p131 = scmp.eq.s32.totalorder %s19, 0
    %p132 = por %p130, %p131
    %s134 = sadd.s32 %s133, 1
    %p137 = scmp.eq.s32.totalorder %s13, 1
    %p138 = scmp.ne.s32.totalorder %s133, %s135
    %p139 = scmp.eq.s32.totalorder %s13, 0
    %p140 = por %p138, %p139
    %p141 = scmp.ne.s32.totalorder %s133, %s135
    %p142 = scmp.eq.s32.totalorder %s18, 1
    %p143 = por %p141, %p142
    %p144 = scmp.ne.s32.totalorder %s135, %s136
    %p145 = scmp.eq.s32.totalorder %s18, 0
    %p146 = por %p144, %p145
    %p147 = scmp.ne.s32.totalorder %s135, %s136
    %p148 = scmp.eq.s32.totalorder %s19, 1
    %p149 = por %p147, %p148
    %p151 = scmp.ne.s32.totalorder %s136, %s150
    %p152 = scmp.eq.s32.totalorder %s19, 0
    %p153 = por %p151, %p152
    %s155 = sadd.s32 %s154, 1
    %p158 = scmp.eq.s32.totalorder %s13, 1
    %p159 = scmp.ne.s32.totalorder %s154, %s156
    %p160 = scmp.eq.s32.totalorder %s13, 0
    %p161 = por %p159, %p160
    %p162 = scmp.ne.s32.totalorder %s154, %s156
    %p163 = scmp.eq.s32.totalorder %s18, 1
    %p164 = por %p162, %p163
    %p165 = scmp.ne.s32.totalorder %s156, %s157
    %p166 = scmp.eq.s32.totalorder %s18, 0
    %p167 = por %p165, %p166
    %p168 = scmp.ne.s32.totalorder %s156, %s157
    %p169 = scmp.eq.s32.totalorder %s19, 1
    %p170 = por %p168, %p169
    %p172 = scmp.ne.s32.totalorder %s157, %s171
    %p173 = scmp.eq.s32.totalorder %s19, 0
    %p174 = por %p172, %p173
    %s176 = sadd.s32 %s175, 1
    %p179 = scmp.eq.s32.totalorder %s13, 1
    %p180 = scmp.ne.s32.totalorder %s175, %s177
    %p181 = scmp.eq.s32.totalorder %s13, 0
    %p182 = por %p180, %p181
    %p183 = scmp.ne.s32.totalorder %s175, %s177
    %p184 = scmp.eq.s32.totalorder %s18, 1
    %p185 = por %p183, %p184
    %p186 = scmp.ne.s32.totalorder %s177, %s178
    %p187 = scmp.eq.s32.totalorder %s18, 0
    %p188 = por %p186, %p187
    %p189 = scmp.ne.s32.totalorder %s177, %s178
    %p190 = scmp.eq.s32.totalorder %s19, 1
    %p191 = por %p189, %p190
    %p193 = scmp.ne.s32.totalorder %s178, %s192
    %p194 = scmp.eq.s32.totalorder %s19, 0
    %p195 = por %p193, %p194
    %s196 = ssub.s32 %s20, %s39
    %s197 = ssub.s32 %s21, %s35
    %s198 = sor.u32 %s196, %s197
    %p199 = scmp.eq.s32.totalorder %s198, 0
    %s201 = sadd.s32 %s200, 1
    %s202 = scalar_select %p199, %s200, %s201
    %p205 = pneg %p199
    %p206 = scmp.eq.s32.totalorder %s13, 1
    %p207 = por %p205, %p206
    %p208 = scmp.ne.s32.totalorder %s200, %s203
    %p209 = scmp.eq.s32.totalorder %s13, 0
    %p210 = por %p208, %p209
    %p211 = scmp.ne.s32.totalorder %s200, %s203
    %p212 = scmp.eq.s32.totalorder %s18, 1
    %p213 = por %p211, %p212
    %p214 = scmp.ne.s32.totalorder %s203, %s204
    %p215 = scmp.eq.s32.totalorder %s18, 0
    %p216 = por %p214, %p215
    %p217 = scmp.ne.s32.totalorder %s203, %s204
    %p218 = scmp.eq.s32.totalorder %s19, 1
    %p219 = por %p217, %p218
    %p221 = scmp.ne.s32.totalorder %s204, %s220
    %p222 = scmp.eq.s32.totalorder %s19, 0
    %p223 = por %p221, %p222
    %p224 = scmp.le.s32.totalorder 1, %s13
    %p225 = scmp.lt.s32.totalorder %s13, 3
    %p226 = pnand %p224, %p225
    %p227 = pneg %p226
    // Predicated region
    $region9: #{tpu_custom_call.1} parent=5 // pred_check
      _
    $region10: #{tpu_custom_call.1} parent=5 // pred_check_branch
      %229 = sbr.rel (%p226) target = $region12
    $region11: #{tpu_custom_call.1} parent=5 // pred_region
      %s230 = ssub.s32 %s13, 1
      // Predicated region
      $region13: #{tpu_custom_call.1} parent=11 // pred_check
        %p231 = pneg %p83
      $region14: #{tpu_custom_call.1} parent=11 // pred_check_branch
        %233 = sbr.rel (%p231) target = $region16
      $region15: #{tpu_custom_call.1} parent=11 // pred_region
        _
      $region16: #{tpu_custom_call.1} parent=11 // pred_fallthru
        _
      // Predicated region
      $region17: #{tpu_custom_call.1} parent=11 // pred_check
        %p234 = pneg %p104
      $region18: #{tpu_custom_call.1} parent=11 // pred_check_branch
        %236 = sbr.rel (%p234) target = $region20
      $region19: #{tpu_custom_call.1} parent=11 // pred_region
        _
      $region20: #{tpu_custom_call.1} parent=11 // pred_fallthru
        _
      // Predicated region
      $region21: #{tpu_custom_call.1} parent=11 // pred_check
        %p237 = pneg %p125
      $region22: #{tpu_custom_call.1} parent=11 // pred_check_branch
        %239 = sbr.rel (%p237) target = $region24
      $region23: #{tpu_custom_call.1} parent=11 // pred_region
        _
      $region24: #{tpu_custom_call.1} parent=11 // pred_fallthru
        _
      // Predicated region
      $region25: #{tpu_custom_call.1} parent=11 // pred_check
        %p240 = pneg %p146
      $region26: #{tpu_custom_call.1} parent=11 // pred_check_branch
        %242 = sbr.rel (%p240) target = $region28
      $region27: #{tpu_custom_call.1} parent=11 // pred_region
        _
      $region28: #{tpu_custom_call.1} parent=11 // pred_fallthru
        _
      // Predicated region
      $region29: #{tpu_custom_call.1} parent=11 // pred_check
        %p243 = pneg %p167
      $region30: #{tpu_custom_call.1} parent=11 // pred_check_branch
        %245 = sbr.rel (%p243) target = $region32
      $region31: #{tpu_custom_call.1} parent=11 // pred_region
        _
      $region32: #{tpu_custom_call.1} parent=11 // pred_fallthru
        _
      // Predicated region
      $region33: #{tpu_custom_call.1} parent=11 // pred_check
        %p246 = pneg %p188
      $region34: #{tpu_custom_call.1} parent=11 // pred_check_branch
        %248 = sbr.rel (%p246) target = $region36
      $region35: #{tpu_custom_call.1} parent=11 // pred_region
        _
      $region36: #{tpu_custom_call.1} parent=11 // pred_fallthru
        _
    $region12: #{tpu_custom_call.1} parent=5 // pred_fallthru
      _
    %p249 = scmp.lt.s32.totalorder %s13, 2
    // Predicated region
    $region37: #{tpu_custom_call.1} parent=5 // pred_check
      %p250 = pneg %p249
    $region38: #{tpu_custom_call.1} parent=5 // pred_check_branch
      %252 = sbr.rel (%p250) target = $region40
    $region39: #{tpu_custom_call.1} parent=5 // pred_region
      // Predicated region
      $region41: #{tpu_custom_call.1} parent=39 // pred_check
        %p253 = pneg %p56
      $region42: #{tpu_custom_call.1} parent=39 // pred_check_branch
        %255 = sbr.rel (%p253) target = $region44
      $region43: #{tpu_custom_call.1} parent=39 // pred_region
        %s256 = sadd.s32 %s21, %s22
        %s257 = smul.u32 2, %s256
        %p258 = scmp.lt.s32.totalorder %s20, 1
        %s259 = scalar_select %p258, %s20, 1
        %p260 = scmp.lt.s32.totalorder %s257, 1
        %s261 = scalar_select %p260, %s257, 1
        %s262 = smul.addr %s259, 2
        %s263 = sadd.s32 %s261, %s262
        %s264 = smul.addr %s263, 4
        %s265 = scalar_lea.vmem %s0, %s264
        %s266 = sadd.s32 %s21, %s22
        %s267 = smul.u32 2, %s266
      $region44: #{tpu_custom_call.1} parent=39 // pred_fallthru
        _
    $region40: #{tpu_custom_call.1} parent=5 // pred_fallthru
      _
    %p268 = scmp.le.s32.totalorder 1, %s13
    %p269 = scmp.lt.s32.totalorder %s13, 3
    %p270 = pnand %p268, %p269
    %p271 = pneg %p270
    // Predicated region
    $region45: #{tpu_custom_call.1} parent=5 // pred_check
      _
    $region46: #{tpu_custom_call.1} parent=5 // pred_check_branch
      %273 = sbr.rel (%p270) target = $region48
    $region47: #{tpu_custom_call.1} parent=5 // pred_region
      %s274 = ssub.s32 %s13, 1
      %s275 = sadd.s32 %s24, %s25
      %s276 = smul.u32 2, %s275
      %p277 = scmp.lt.s32.totalorder %s23, 1
      %s278 = scalar_select %p277, %s23, 1
      %p279 = scmp.lt.s32.totalorder %s276, 1
      %s280 = scalar_select %p279, %s276, 1
      %s281 = smul.addr %s278, 2
      %s282 = sadd.s32 %s280, %s281
      %s283 = smul.addr %s282, 4
      %s284 = scalar_lea.vmem %s0, %s283
      %p285 = pneg %p62
      %p286 = pneg %p59
      %p287 = pneg %p83
      %p288 = pneg %p80
      %p289 = pneg %p104
      %p290 = pneg %p101
      %p291 = pneg %p125
      %p292 = pneg %p122
      %p293 = pneg %p146
      %p294 = pneg %p143
      %p295 = pneg %p167
      %p296 = pneg %p164
      %p297 = pneg %p188
      %p298 = pneg %p185
      %p299 = pneg %p216
      %p300 = pneg %p213
      %p301 = scmp.lt.s32.totalorder %s23, 1
      %s302 = scalar_select %p301, %s23, 1
      %p303 = scmp.lt.s32.totalorder %s24, 0
      %s304 = scalar_select %p303, %s24, 0
      %s305 = smul.addr %s304, 4
      %s306 = smul.addr %s302, 4
      %s307 = sadd.s32 %s305, %s306
      %s308 = smul.addr %s307, 8
      %s309 = scalar_lea.vmem %s7, %s308
      %s310 = sadd.s32 %s24, %s25
      %s311 = smul.u32 2, %s310
      %p312 = scmp.lt.s32.totalorder %s23, 1
      %s313 = scalar_select %p312, %s23, 1
      %p314 = scmp.lt.s32.totalorder %s311, 1
      %s315 = scalar_select %p314, %s311, 1
      %s316 = smul.addr %s313, 2
      %s317 = sadd.s32 %s315, %s316
      %s318 = smul.addr %s317, 4
      %s319 = scalar_lea.vmem %s0, %s318
      %s320 = sadd.s32 %s24, %s25
      %s321 = smul.u32 2, %s320
      %p322 = scmp.lt.s32.totalorder %s23, 1
      %s323 = scalar_select %p322, %s23, 1
      %p324 = scmp.lt.s32.totalorder %s24, 0
      %s325 = scalar_select %p324, %s24, 0
      %s326 = smul.addr %s325, 4
      %s327 = smul.addr %s323, 4
      %s328 = sadd.s32 %s326, %s327
      %s329 = smul.addr %s328, 8
      %s330 = scalar_lea.vmem %s7, %s329
      %p332 = scmp.eq.s32.totalorder %s25, 0
      // Predicated region
      $region49: #{tpu_custom_call.1} parent=47 // pred_check
        %p333 = pneg %p332
      $region50: #{tpu_custom_call.1} parent=47 // pred_check_branch
        %335 = sbr.rel (%p333) target = $region52
      $region51: #{tpu_custom_call.1} parent=47 // pred_region
        %336 = vst [vmem:[#allocation2] sm:$0xff] 0.0
        %337 = vst [vmem:[#allocation2 + $0x8] sm:$0xff] 0.0
        %338 = vst [vmem:[#allocation2 + $0x10] sm:$0xff] 0.0
        %339 = vst [vmem:[#allocation2 + $0x18] sm:$0xff] 0.0
      $region52: #{tpu_custom_call.1} parent=47 // pred_fallthru
        _
      %v340 = vld [vmem:[%s319] sm:$0xff]
      %v341 = vld [vmem:[%s1] sm:$0xff]
      %v342 = vld [vmem:[%s1 + $0x8] sm:$0xff]
      %344 = vset.pattern.permute.xlu0 0
      %345 = vperm.xlu0 %344, %v341
      %v346 = vpop.permute.xlu0 %345
      %349 = vset.pattern.permute.xlu0 0
      %350 = vperm.xlu0 %349, %v342
      %v351 = vpop.permute.xlu0 %350
      %v354 = vlaneseq
      %v355 = vshrl.u32 %v354, 7
      %v356 = vsub.s32 0, %v355
      %v357 = vrot.slane %v340, %v356
      %v358 = vlaneseq
      %v359 = vshrl.u32 %v358, 7
      %v360 = vsub.s32 4, %v359
      %v361 = vrot.slane %v340, %v360
      %v364 = vlaneseq
      %v365 = vshrl.u32 %v364, 7
      %v366 = vsub.s32 0, %v365
      %v367 = vrot.slane %v357, %v366
      %v368 = vlaneseq
      %v369 = vshrl.u32 %v368, 7
      %v370 = vsub.s32 0, %v369
      %v371 = vrot.slane %v361, %v370
      %v372 = vmul.f32 %v346, %v367
      %v373 = vmul.f32 %v346, %v371
      %v374 = vmul.f32 %v351, %v367
      %v375 = vmul.f32 %v351, %v371
      %376 = vset.pattern.permute.xlu0 1
      %377 = vperm.xlu0 %376, %v341
      %v378 = vpop.permute.xlu0 %377
      %380 = vset.pattern.permute.xlu0 1
      %381 = vperm.xlu0 %380, %v342
      %v382 = vpop.permute.xlu0 %381
      %v384 = vlaneseq
      %v385 = vshrl.u32 %v384, 7
      %v386 = vsub.s32 1, %v385
      %v387 = vrot.slane %v340, %v386
      %v388 = vlaneseq
      %v389 = vshrl.u32 %v388, 7
      %v390 = vsub.s32 5, %v389
      %v391 = vrot.slane %v340, %v390
      %v394 = vlaneseq
      %v395 = vshrl.u32 %v394, 7
      %v396 = vsub.s32 1, %v395
      %v397 = vrot.slane %v387, %v396
      %v398 = vlaneseq
      %v399 = vshrl.u32 %v398, 7
      %v400 = vsub.s32 1, %v399
      %v401 = vrot.slane %v391, %v400
      %v402 = vmul.f32 %v378, %v397
      %v403 = vmul.f32 %v378, %v401
      %v404 = vmul.f32 %v382, %v397
      %v405 = vmul.f32 %v382, %v401
      %v406 = vadd.f32 %v372, %v402
      %v407 = vadd.f32 %v373, %v403
      %v408 = vadd.f32 %v374, %v404
      %v409 = vadd.f32 %v375, %v405
      %410 = vset.pattern.permute.xlu0 2
      %411 = vperm.xlu0 %410, %v341
      %v412 = vpop.permute.xlu0 %411
      %414 = vset.pattern.permute.xlu0 2
      %415 = vperm.xlu0 %414, %v342
      %v416 = vpop.permute.xlu0 %415
      %v418 = vlaneseq
      %v419 = vshrl.u32 %v418, 7
      %v420 = vsub.s32 2, %v419
      %v421 = vrot.slane %v340, %v420
      %v422 = vlaneseq
      %v423 = vshrl.u32 %v422, 7
      %v424 = vsub.s32 6, %v423
      %v425 = vrot.slane %v340, %v424
      %v428 = vlaneseq
      %v429 = vshrl.u32 %v428, 7
      %v430 = vsub.s32 2, %v429
      %v431 = vrot.slane %v421, %v430
      %v432 = vlaneseq
      %v433 = vshrl.u32 %v432, 7
      %v434 = vsub.s32 2, %v433
      %v435 = vrot.slane %v425, %v434
      %v436 = vmul.f32 %v412, %v431
      %v437 = vmul.f32 %v412, %v435
      %v438 = vmul.f32 %v416, %v431
      %v439 = vmul.f32 %v416, %v435
      %v440 = vadd.f32 %v406, %v436
      %v441 = vadd.f32 %v407, %v437
      %v442 = vadd.f32 %v408, %v438
      %v443 = vadd.f32 %v409, %v439
      %444 = vset.pattern.permute.xlu0 3
      %445 = vperm.xlu0 %444, %v341
      %v446 = vpop.permute.xlu0 %445
      %448 = vset.pattern.permute.xlu0 3
      %449 = vperm.xlu0 %448, %v342
      %v450 = vpop.permute.xlu0 %449
      %v452 = vlaneseq
      %v453 = vshrl.u32 %v452, 7
      %v454 = vsub.s32 3, %v453
      %v455 = vrot.slane %v340, %v454
      %v456 = vlaneseq
      %v457 = vshrl.u32 %v456, 7
      %v458 = vsub.s32 7, %v457
      %v459 = vrot.slane %v340, %v458
      %v462 = vlaneseq
      %v463 = vshrl.u32 %v462, 7
      %v464 = vsub.s32 3, %v463
      %v465 = vrot.slane %v455, %v464
      %v466 = vlaneseq
      %v467 = vshrl.u32 %v466, 7
      %v468 = vsub.s32 3, %v467
      %v469 = vrot.slane %v459, %v468
      %v470 = vmul.f32 %v446, %v465
      %v471 = vmul.f32 %v446, %v469
      %v472 = vmul.f32 %v450, %v465
      %v473 = vmul.f32 %v450, %v469
      %v474 = vadd.f32 %v440, %v470
      %v475 = vadd.f32 %v441, %v471
      %v476 = vadd.f32 %v442, %v472
      %v477 = vadd.f32 %v443, %v473
      %v478 = vld [vmem:[%s2] sm:$0xff]
      %v479 = vld [vmem:[%s2 + $0x8] sm:$0xff]
      %481 = vset.pattern.permute.xlu0 0
      %482 = vperm.xlu0 %481, %v478
      %v483 = vpop.permute.xlu0 %482
      %486 = vset.pattern.permute.xlu0 0
      %487 = vperm.xlu0 %486, %v479
      %v488 = vpop.permute.xlu0 %487
      %v490 = vadd.f32 %v474, %v483
      %v491 = vadd.f32 %v475, %v483
      %v492 = vadd.f32 %v476, %v488
      %v493 = vadd.f32 %v477, %v488
      %v494 = vmax.f32 %v490, 0.0
      %v495 = vmax.f32 %v491, 0.0
      %v496 = vmax.f32 %v492, 0.0
      %v497 = vmax.f32 %v493, 0.0
      %v498 = vld [vmem:[%s3] sm:$0xf]
      %v499 = vld [vmem:[%s3 + $0x4] sm:$0xf]
      %v500 = vpack.c.bf16 %v496, %v494
      %v501 = vpack.c.bf16 %v497, %v495
      %v502 = vld [vmem:[%s4] sm:$0xff]
      %v503 = vld [vmem:[%s4 + $0x8] sm:$0xff]
      %505 = vset.pattern.permute.xlu0 0
      %506 = vperm.xlu0 %505, %v502
      %v507 = vpop.permute.xlu0 %506
      %510 = vset.pattern.permute.xlu0 0
      %511 = vperm.xlu0 %510, %v503
      %v512 = vpop.permute.xlu0 %511
      %v516 = vunpack.c.l.b16 %v498
      %v517 = vunpack.c.l.b16 %v499
      %v518 = vpack.c.b16 %v517, %v516
      %vm519 = vcmask 130048
      %v521 = vsel %vm519, %v518, 0
      %523 = vmatprep.subr.bf16.mxu0 0
      %524 = vmatpush1.bf16.msra.mxu0 0
      %525 = vmatprep.subr.bf16.mxu0 0
      %526 = vmatpush1.bf16.msra.mxu0 0
      %527 = vmatprep.subr.bf16.mxu0 0
      %528 = vmatpush1.bf16.msra.mxu0 0
      %529 = vmatprep.subr.bf16.mxu0 0
      %530 = vmatpush1.bf16.msra.mxu0 0
      %531 = vmatprep.subr.bf16.mxu0 0
      %532 = vmatpush1.bf16.msra.mxu0 0
      %533 = vmatprep.subr.bf16.mxu0 0
      %534 = vmatpush1.bf16.msra.mxu0 0
      %535 = vmatprep.subr.bf16.mxu0 0
      %536 = vmatpush1.bf16.msra.mxu0 0
      %537 = vmatprep.subr.bf16.mxu0 %v501
      %538 = vmatpush1.bf16.msra.mxu0 %v500
      %539 = vmatprep.subr.bf16.mxu0 0
      %540 = vmatpush2.bf16.msra.mxu0 0
      %541 = vmatprep.subr.bf16.mxu0 0
      %542 = vmatpush2.bf16.msra.mxu0 0
      %543 = vmatprep.subr.bf16.mxu0 0
      %544 = vmatpush2.bf16.msra.mxu0 0
      %545 = vmatprep.subr.bf16.mxu0 0
      %546 = vmatpush2.bf16.msra.mxu0 0
      %547 = vmatprep.subr.bf16.mxu0 0
      %548 = vmatpush2.bf16.msra.mxu0 0
      %549 = vmatprep.subr.bf16.mxu0 0
      %550 = vmatpush2.bf16.msra.mxu0 0
      %551 = vmatprep.subr.bf16.mxu0 0
      %552 = vmatpush2.bf16.msra.mxu0 0
      %553 = vmatprep.subr.bf16.mxu0 0
      %554 = vmatpush2.bf16.msra.mxu0 0
      %555 = vmatprep.mubr.bf16.mxu0 0
      %556 = vmatmul.mubr.bf16.gmra.mxu0 %v521
      %v557 = vpop.f32.mrf.mxu0
      %v558 = vadd.f32 %v507, %v557
      %v559 = vpop.f32.mrf.mxu0
      %v560 = vadd.f32 %v507, %v559
      %v561 = vpop.f32.mrf.mxu0
      %v562 = vadd.f32 %v512, %v561
      %v563 = vpop.f32.mrf.mxu0
      %v564 = vadd.f32 %v512, %v563
      %565 = vdwg.mxu0
      %v566 = vmax.f32 %v558, 0.0
      %v567 = vmax.f32 %v560, 0.0
      %v568 = vmax.f32 %v562, 0.0
      %v569 = vmax.f32 %v564, 0.0
      %v570 = vld [vmem:[%s5] sm:$0xf]
      %v571 = vld [vmem:[%s5 + $0x4] sm:$0xf]
      %v572 = vld [vmem:[%s5 + $0x8] sm:$0xf]
      %v573 = vld [vmem:[%s5 + $0xc] sm:$0xf]
      %v574 = vpack.c.bf16 %v568, %v566
      %v575 = vpack.c.bf16 %v569, %v567
      %v576 = vld [vmem:[%s6] sm:$0xff]
      %v577 = vld [vmem:[%s6 + $0x8] sm:$0xff]
      %v578 = vld [vmem:[%s6 + $0x10] sm:$0xff]
      %v579 = vld [vmem:[%s6 + $0x18] sm:$0xff]
      %581 = vset.pattern.permute.xlu0 0
      %582 = vperm.xlu0 %581, %v576
      %v583 = vpop.permute.xlu0 %582
      %586 = vset.pattern.permute.xlu0 0
      %587 = vperm.xlu0 %586, %v577
      %v588 = vpop.permute.xlu0 %587
      %591 = vset.pattern.permute.xlu0 0
      %592 = vperm.xlu0 %591, %v578
      %v593 = vpop.permute.xlu0 %592
      %596 = vset.pattern.permute.xlu0 0
      %597 = vperm.xlu0 %596, %v579
      %v598 = vpop.permute.xlu0 %597
      %v604 = vunpack.c.l.b16 %v570
      %v605 = vunpack.c.l.b16 %v571
      %v606 = vunpack.c.l.b16 %v572
      %v607 = vunpack.c.l.b16 %v573
      %v608 = vpack.c.b16 %v605, %v604
      %v609 = vpack.c.b16 %v607, %v606
      %v611 = vsel %vm519, %v608, 0
      %v614 = vsel %vm519, %v609, 0
      %616 = vmatprep.subr.bf16.mxu0 0
      %617 = vmatpush1.bf16.msra.mxu0 0
      %618 = vmatprep.subr.bf16.mxu0 0
      %619 = vmatpush1.bf16.msra.mxu0 0
      %620 = vmatprep.subr.bf16.mxu0 0
      %621 = vmatpush1.bf16.msra.mxu0 0
      %622 = vmatprep.subr.bf16.mxu0 0
      %623 = vmatpush1.bf16.msra.mxu0 0
      %624 = vmatprep.subr.bf16.mxu0 0
      %625 = vmatpush1.bf16.msra.mxu0 0
      %626 = vmatprep.subr.bf16.mxu0 0
      %627 = vmatpush1.bf16.msra.mxu0 0
      %628 = vmatprep.subr.bf16.mxu0 0
      %629 = vmatpush1.bf16.msra.mxu0 0
      %630 = vmatprep.subr.bf16.mxu0 %v575
      %631 = vmatpush1.bf16.msra.mxu0 %v574
      %632 = vmatprep.subr.bf16.mxu0 0
      %633 = vmatpush2.bf16.msra.mxu0 0
      %634 = vmatprep.subr.bf16.mxu0 0
      %635 = vmatpush2.bf16.msra.mxu0 0
      %636 = vmatprep.subr.bf16.mxu0 0
      %637 = vmatpush2.bf16.msra.mxu0 0
      %638 = vmatprep.subr.bf16.mxu0 0
      %639 = vmatpush2.bf16.msra.mxu0 0
      %640 = vmatprep.subr.bf16.mxu0 0
      %641 = vmatpush2.bf16.msra.mxu0 0
      %642 = vmatprep.subr.bf16.mxu0 0
      %643 = vmatpush2.bf16.msra.mxu0 0
      %644 = vmatprep.subr.bf16.mxu0 0
      %645 = vmatpush2.bf16.msra.mxu0 0
      %646 = vmatprep.subr.bf16.mxu0 0
      %647 = vmatpush2.bf16.msra.mxu0 0
      %648 = vmatprep.mubr.bf16.mxu0 0
      %649 = vmatmul.mubr.bf16.gmra.mxu0 %v611
      %v650 = vpop.f32.mrf.mxu0
      %v651 = vadd.f32 %v583, %v650
      %v652 = vpop.f32.mrf.mxu0
      %v653 = vadd.f32 %v583, %v652
      %v654 = vpop.f32.mrf.mxu0
      %v655 = vadd.f32 %v588, %v654
      %v656 = vpop.f32.mrf.mxu0
      %v657 = vadd.f32 %v588, %v656
      %658 = vmatprep.mubr.bf16.mxu0 0
      %659 = vmatmul.mubr.bf16.gmra.mxu0 %v614
      %v660 = vpop.f32.mrf.mxu0
      %v661 = vadd.f32 %v593, %v660
      %v662 = vpop.f32.mrf.mxu0
      %v663 = vadd.f32 %v593, %v662
      %v664 = vpop.f32.mrf.mxu0
      %v665 = vadd.f32 %v598, %v664
      %v666 = vpop.f32.mrf.mxu0
      %v667 = vadd.f32 %v598, %v666
      %668 = vdwg.mxu0
      %v669 = vmax.f32 %v651, 0.0
      %v670 = vmax.f32 %v653, 0.0
      %v671 = vmax.f32 %v655, 0.0
      %v672 = vmax.f32 %v657, 0.0
      %v673 = vmax.f32 %v661, 0.0
      %v674 = vmax.f32 %v663, 0.0
      %v675 = vmax.f32 %v665, 0.0
      %v676 = vmax.f32 %v667, 0.0
      %v677 = vmax.f32 %v669, %v670
      %v678 = vmax.f32 %v671, %v672
      %v679 = vmax.f32 %v673, %v674
      %v680 = vmax.f32 %v675, %v676
      %v681 = vld [vmem:[#allocation2] sm:$0xff]
      %v682 = vld [vmem:[#allocation2 + $0x8] sm:$0xff]
      %v683 = vld [vmem:[#allocation2 + $0x10] sm:$0xff]
      %v684 = vld [vmem:[#allocation2 + $0x18] sm:$0xff]
      %v685 = vmax.f32 %v681, %v677
      %v686 = vmax.f32 %v682, %v678
      %v687 = vmax.f32 %v683, %v679
      %v688 = vmax.f32 %v684, %v680
      %689 = vst [vmem:[#allocation2] sm:$0xff] %v685
      %690 = vst [vmem:[#allocation2 + $0x8] sm:$0xff] %v686
      %691 = vst [vmem:[#allocation2 + $0x10] sm:$0xff] %v687
      %692 = vst [vmem:[#allocation2 + $0x18] sm:$0xff] %v688
      // Predicated region
      $region53: #{tpu_custom_call.1} parent=47 // pred_check
        %p693 = pneg %p332
      $region54: #{tpu_custom_call.1} parent=47 // pred_check_branch
        %695 = sbr.rel (%p693) target = $region56
      $region55: #{tpu_custom_call.1} parent=47 // pred_region
        %v696 = vld [vmem:[#allocation2] sm:$0xff]
        %v697 = vld [vmem:[#allocation2 + $0x8] sm:$0xff]
        %v698 = vld [vmem:[#allocation2 + $0x10] sm:$0xff]
        %v699 = vld [vmem:[#allocation2 + $0x18] sm:$0xff]
        %700 = vmax.xlane.f32.xlu0 %v696
        %v701 = vpop.xlane.xlu0 %700
        %702 = vmax.xlane.f32.xlu0 %v697
        %v703 = vpop.xlane.xlu0 %702
        %704 = vmax.xlane.f32.xlu0 %v698
        %v705 = vpop.xlane.xlu0 %704
        %706 = vmax.xlane.f32.xlu0 %v699
        %v707 = vpop.xlane.xlu0 %706
        %vm708 = vcmask 7168
        %709 = vst.msk [vmem:[%s330] sm:$0xff] %vm708, %v701
        %710 = vst.msk [vmem:[%s330 + $0x8] sm:$0xff] %vm708, %v703
        %711 = vst.msk [vmem:[%s330 + $0x10] sm:$0xff] %vm708, %v705
        %712 = vst.msk [vmem:[%s330 + $0x18] sm:$0xff] %vm708, %v707
      $region56: #{tpu_custom_call.1} parent=47 // pred_fallthru
        _
      %p713 = scmp.lt.s32.totalorder %s23, 1
      %s714 = scalar_select %p713, %s23, 1
      %p715 = scmp.lt.s32.totalorder %s24, 0
      %s716 = scalar_select %p715, %s24, 0
      %s717 = smul.addr %s716, 4
      %s718 = smul.addr %s714, 4
      %s719 = sadd.s32 %s717, %s718
      %s720 = smul.addr %s719, 8
      %s721 = scalar_lea.vmem %s7, %s720
      // Predicated region
      $region57: #{tpu_custom_call.1} parent=47 // pred_check
        %p722 = pneg %p213
      $region58: #{tpu_custom_call.1} parent=47 // pred_check_branch
        %724 = sbr.rel (%p722) target = $region60
      $region59: #{tpu_custom_call.1} parent=47 // pred_region
        _
      $region60: #{tpu_custom_call.1} parent=47 // pred_fallthru
        _
    $region48: #{tpu_custom_call.1} parent=5 // pred_fallthru
      _
    %p725 = scmp.le.s32.totalorder 2, %s13
    // Predicated region
    $region61: #{tpu_custom_call.1} parent=5 // pred_check
      %p726 = pneg %p725
    $region62: #{tpu_custom_call.1} parent=5 // pred_check_branch
      %728 = sbr.rel (%p726) target = $region64
    $region63: #{tpu_custom_call.1} parent=5 // pred_region
      %s729 = ssub.s32 %s13, 2
      // Predicated region
      $region65: #{tpu_custom_call.1} parent=63 // pred_check
        %p730 = pneg %p219
      $region66: #{tpu_custom_call.1} parent=63 // pred_check_branch
        %732 = sbr.rel (%p730) target = $region68
      $region67: #{tpu_custom_call.1} parent=63 // pred_region
        %p733 = scmp.lt.s32.totalorder %s26, 1
        %s734 = scalar_select %p733, %s26, 1
        %p735 = scmp.lt.s32.totalorder %s27, 0
        %s736 = scalar_select %p735, %s27, 0
        %s737 = smul.addr %s736, 4
        %s738 = smul.addr %s734, 4
        %s739 = sadd.s32 %s737, %s738
        %s740 = smul.addr %s739, 8
        %s741 = scalar_lea.vmem %s7, %s740
      $region68: #{tpu_custom_call.1} parent=63 // pred_fallthru
        _
    $region64: #{tpu_custom_call.1} parent=5 // pred_fallthru
      _
  $region6: #{tpu_custom_call.1} parent=0 // loop_footer
    %s17 = sadd.s32 1, %s13
  $region7: #{tpu_custom_call.1} parent=0 // loop_footer_branch
    %12 = sbr.rel target = $region3
  $region8: #{tpu_custom_call.1} parent=0 // loop_exit
    _

</llo_original>
